<compile_context>
chip_gen: v5e
topology: v5e:2x2
jax: 0.10.0
libtpu: 0.0.40
codegen_flags: <defaults>
</compile_context>

<pallas_src>
import math

import jax
import jax.numpy as jnp
from jax.experimental import pallas as pl
from jax.experimental.pallas import tpu as pltpu

# ---- sigma_net constants (from __init__ defaults) ---------------------------
MIN_SIGMA_SQ = 1e-4
MAX_SIGMA_SQ = 1e-2
MIN_LOG = math.log(MIN_SIGMA_SQ)   # self.min = log(min_sigma_sq)
MAX_LOG = math.log(MAX_SIGMA_SQ)   # self.max = log(max_sigma_sq)

# ---- model dims (small, consistent with the forward pass) -------------------
B = 8                  # batch
LATENT = 16            # decoder latent dim
C, H, W = 4, 16, 16    # decoder output (NCHW)
CHW = C * H * W
NH = 128               # nh_mlp (512 in the default config; 128 keeps it small)
OUT_LANES = 128        # lane-padded width of the final Linear(NH, 1)


# =============================== Pallas kernel ===============================
def _sigma_net_kernel(z_ref, dw_ref, db_ref, ew_ref, eb_ref,
                      w1_ref, b1_ref, w2_ref, b2_ref, w3_ref, b3_ref, o_ref):
    # decoder(z): linear stand-in (torch runs it under no_grad; fwd math same)
    z = z_ref[...]                                                  # (TB, LATENT) f32
    x_bar = jnp.dot(z, dw_ref[...],
                    preferred_element_type=jnp.float32) + db_ref[...]   # (TB, CHW)

    # encoder.get_feature: global avg-pool over HxW + linear, folded into ew_ref
    feat = jnp.dot(x_bar, ew_ref[...],
                   preferred_element_type=jnp.float32) + eb_ref[...]    # (TB, NH)

    # fc_nets: bf16 MXU inputs, f32 accumulation, f32 elementwise path
    h = jnp.dot(feat.astype(jnp.bfloat16), w1_ref[...],
                preferred_element_type=jnp.float32) + b1_ref[...]
    h = jnp.maximum(h, 0.0)                                         # ReLU
    h = jnp.dot(h.astype(jnp.bfloat16), w2_ref[...],
                preferred_element_type=jnp.float32) + b2_ref[...]
    h = jnp.maximum(h, 0.0)                                         # ReLU
    y = jnp.dot(h.astype(jnp.bfloat16), w3_ref[...],
                preferred_element_type=jnp.float32) + b3_ref[0, 0]  # (TB, 128)

    # sigmoid via EUP exp + approx reciprocal, then map into [min, max] sigma^2
    s = pl.reciprocal(1.0 + jnp.exp(-y), approx=True)
    o_ref[...] = jnp.exp(MIN_LOG + (MAX_LOG - MIN_LOG) * s)         # lane-dense store


# ================================ full forward ===============================
def sigma_net_forward(params, z, tb=None):
    b = z.shape[0]
    tb = b if tb is None else min(tb, b)
    nb = pl.cdiv(b, tb)

    dec, enc, fc = params["dec"], params["enc"], params["fc"]

    # Fold "mean over HxW, then @ enc.w" into one (C*H*W, NH) matmul weight:
    #   pooled @ W  ==  x_bar_flat @ repeat(W / (H*W), H*W, axis=0)
    enc_w_eff = jnp.repeat(enc["w"] / float(H * W), H * W, axis=0)  # (CHW, NH) f32

    # bf16 fc weights; lane-pad the final Linear(NH,1): only column 0 is real.
    w1 = fc["w1"].astype(jnp.bfloat16)
    w2 = fc["w2"].astype(jnp.bfloat16)
    w3p = jnp.zeros((NH, OUT_LANES), jnp.bfloat16).at[:, 0].set(
        fc["w3"][:, 0].astype(jnp.bfloat16))

    vmem = pltpu.MemorySpace.VMEM
    smem = pltpu.MemorySpace.SMEM
    const = lambda i: (0, 0)

    in_specs = [
        pl.BlockSpec((tb, LATENT), lambda i: (i, 0), memory_space=vmem),  # z
        pl.BlockSpec((LATENT, CHW), const, memory_space=vmem),            # dec.w
        pl.BlockSpec((1, CHW), const, memory_space=vmem),                 # dec.b
        pl.BlockSpec((CHW, NH), const, memory_space=vmem),                # enc_w_eff
        pl.BlockSpec((1, NH), const, memory_space=vmem),                  # enc.b
        pl.BlockSpec((NH, NH), const, memory_space=vmem),                 # w1 (bf16)
        pl.BlockSpec((1, NH), const, memory_space=vmem),                  # b1
        pl.BlockSpec((NH, NH), const, memory_space=vmem),                 # w2 (bf16)
        pl.BlockSpec((1, NH), const, memory_space=vmem),                  # b2
        pl.BlockSpec((NH, OUT_LANES), const, memory_space=vmem),          # w3 padded
        pl.BlockSpec(memory_space=smem),                                  # b3 scalar
    ]
    out_spec = pl.BlockSpec((tb, OUT_LANES), lambda i: (i, 0), memory_space=vmem)

    args = (z.astype(jnp.float32), dec["w"], dec["b"], enc_w_eff, enc["b"],
            w1, fc["b1"], w2, fc["b2"], w3p, fc["b3"])

    bytes_accessed = sum(int(a.size) * a.dtype.itemsize for a in args)
    bytes_accessed += b * OUT_LANES * 4
    flops = 2 * b * (LATENT * CHW + CHW * NH + NH * NH + NH * NH + NH * OUT_LANES)
    transcendentals = 3 * b * OUT_LANES

    out = pl.pallas_call(
        _sigma_net_kernel,
        out_shape=jax.ShapeDtypeStruct((b, OUT_LANES), jnp.float32),
        grid_spec=pltpu.PrefetchScalarGridSpec(
            num_scalar_prefetch=0,
            grid=(nb,),
            in_specs=in_specs,
            out_specs=out_spec,
        ),
        compiler_params=pltpu.CompilerParams(
            dimension_semantics=("parallel",)),
        cost_estimate=pl.CostEstimate(
            flops=flops,
            transcendentals=transcendentals,
            bytes_accessed=bytes_accessed),
    )(*args)

    return out[:, :1]   # column 0 of the lane-dense slab = Linear(NH,1) output


# ============================ deterministic params ===========================
def init_params(key):
    ks = jax.random.split(key, 10)
    scale = 0.05
    fc = {
        "w1": scale * jax.random.normal(ks[0], (NH, NH), jnp.float32),
        "b1": scale * jax.random.normal(ks[1], (1, NH), jnp.float32),
        "w2": scale * jax.random.normal(ks[2], (NH, NH), jnp.float32),
        "b2": scale * jax.random.normal(ks[3], (1, NH), jnp.float32),
        "w3": scale * jax.random.normal(ks[4], (NH, 1), jnp.float32),
        "b3": scale * jax.random.normal(ks[5], (1, 1), jnp.float32),
    }
    dec = {
        "w": scale * jax.random.normal(ks[6], (LATENT, CHW), jnp.float32),
        "b": scale * jax.random.normal(ks[7], (1, CHW), jnp.float32),
    }
    enc = {
        "w": scale * jax.random.normal(ks[8], (C, NH), jnp.float32),
        "b": scale * jax.random.normal(ks[9], (1, NH), jnp.float32),
    }
    return {"fc": fc, "dec": dec, "enc": enc}


# =============================== reference (JAX) =============================
def sigma_net_ref(params, z):
    """Pure-JAX reference mirroring the torch semantics (pool -> linear),
    using the bf16-rounded fc weights the kernel sees (math in f32)."""
    dec, enc, fc = params["dec"], params["enc"], params["fc"]
    x_bar = (z @ dec["w"] + dec["b"]).reshape(z.shape[0], C, H, W)  # decoder (NCHW)
    pooled = x_bar.mean(axis=(2, 3))                                # (B, C)
    feat = pooled @ enc["w"] + enc["b"]                             # (B, NH)
    w1 = fc["w1"].astype(jnp.bfloat16).astype(jnp.float32)
    w2 = fc["w2"].astype(jnp.bfloat16).astype(jnp.float32)
    w3 = fc["w3"].astype(jnp.bfloat16).astype(jnp.float32)
    h = jnp.maximum(feat @ w1 + fc["b1"], 0.0)
    h = jnp.maximum(h @ w2 + fc["b2"], 0.0)
    y = h @ w3 + fc["b3"]
    s = jax.nn.sigmoid(y)
    return jnp.exp(MIN_LOG + (MAX_LOG - MIN_LOG) * s)


if __name__ == "__main__":
    key = jax.random.PRNGKey(0)
    pkey, zkey = jax.random.split(key)
    params = init_params(pkey)
    z = jax.random.normal(zkey, (B, LATENT), jnp.float32)

    fwd = jax.jit(sigma_net_forward)
    out = jax.block_until_ready(fwd(params, z))
    assert out.shape == (B, 1), out.shape

    ref = sigma_net_ref(params, z)
    # bf16 weights + bf16 MXU activations + approx reciprocal -> loosened tol
    assert jnp.allclose(out, ref, rtol=2e-2, atol=1e-6), (out, ref)
    # output must lie in [min_sigma_sq, max_sigma_sq] (tiny slack for approx rcp)
    assert bool(jnp.all(out >= MIN_SIGMA_SQ * 0.98))
    assert bool(jnp.all(out <= MAX_SIGMA_SQ * 1.02))

    print("KERNEL_OK")
</pallas_src>

<mosaic_0001>
module attributes {stable_mosaic.version = 11 : i64} {
  func.func @_sigma_net_kernel(%arg0: i32, %arg1: memref<8x16xf32, #tpu.memory_space<vmem>>, %arg2: memref<16x1024xf32, #tpu.memory_space<vmem>>, %arg3: memref<1x1024xf32, #tpu.memory_space<vmem>>, %arg4: memref<1024x128xf32, #tpu.memory_space<vmem>>, %arg5: memref<1x128xf32, #tpu.memory_space<vmem>>, %arg6: memref<128x128xbf16, #tpu.memory_space<vmem>>, %arg7: memref<1x128xf32, #tpu.memory_space<vmem>>, %arg8: memref<128x128xbf16, #tpu.memory_space<vmem>>, %arg9: memref<1x128xf32, #tpu.memory_space<vmem>>, %arg10: memref<128x128xbf16, #tpu.memory_space<vmem>>, %arg11: memref<1x1xf32, #tpu.memory_space<smem>>, %arg12: memref<8x128xf32, #tpu.memory_space<vmem>>) attributes {dimension_semantics = [#tpu.dimension_semantics<parallel>], iteration_bounds = array<i64: 1>, scalar_prefetch = 0 : i64, scratch_operands = 0 : i64, tpu.core_type = #tpu.core_type<tc>, window_params = [{transform_indices = @transform_0, window_bounds = array<i64: 8, 16>}, {pipeline_mode = #tpu.pipeline_mode<synchronous>, transform_indices = @transform_1, window_bounds = array<i64: 16, 1024>}, {pipeline_mode = #tpu.pipeline_mode<synchronous>, transform_indices = @transform_2, window_bounds = array<i64: 1, 1024>}, {pipeline_mode = #tpu.pipeline_mode<synchronous>, transform_indices = @transform_3, window_bounds = array<i64: 1024, 128>}, {pipeline_mode = #tpu.pipeline_mode<synchronous>, transform_indices = @transform_4, window_bounds = array<i64: 1, 128>}, {pipeline_mode = #tpu.pipeline_mode<synchronous>, transform_indices = @transform_5, window_bounds = array<i64: 128, 128>}, {pipeline_mode = #tpu.pipeline_mode<synchronous>, transform_indices = @transform_6, window_bounds = array<i64: 1, 128>}, {pipeline_mode = #tpu.pipeline_mode<synchronous>, transform_indices = @transform_7, window_bounds = array<i64: 128, 128>}, {pipeline_mode = #tpu.pipeline_mode<synchronous>, transform_indices = @transform_8, window_bounds = array<i64: 1, 128>}, {pipeline_mode = #tpu.pipeline_mode<synchronous>, transform_indices = @transform_9, window_bounds = array<i64: 128, 128>}, {transform_indices = @transform_10, window_bounds = array<i64: 1, 1>}, {transform_indices = @transform_11, window_bounds = array<i64: 8, 128>}]} {
    %c0 = arith.constant 0 : index
    %c0_0 = arith.constant 0 : index
    %0 = vector.load %arg1[%c0, %c0_0] : memref<8x16xf32, #tpu.memory_space<vmem>>, vector<8x16xf32>
    %c0_1 = arith.constant 0 : index
    %c0_2 = arith.constant 0 : index
    %1 = vector.load %arg2[%c0_1, %c0_2] : memref<16x1024xf32, #tpu.memory_space<vmem>>, vector<16x1024xf32>
    %cst = arith.constant dense<0.000000e+00> : vector<8x1024xf32>
    %2 = tpu.matmul %0, %1, %cst {dimension_numbers = #tpu.dot_dimension_numbers<[1], [0], [0], [1], [0, 0, 1, 1], [], []>} : vector<8x16xf32>, vector<16x1024xf32>, vector<8x1024xf32> -> vector<8x1024xf32>
    %c0_3 = arith.constant 0 : index
    %c0_4 = arith.constant 0 : index
    %3 = vector.load %arg3[%c0_3, %c0_4] : memref<1x1024xf32, #tpu.memory_space<vmem>>, vector<1x1024xf32>
    %4 = vector.broadcast %3 : vector<1x1024xf32> to vector<8x1024xf32>
    %5 = arith.addf %2, %4 : vector<8x1024xf32>
    %c0_5 = arith.constant 0 : index
    %c0_6 = arith.constant 0 : index
    %6 = vector.load %arg4[%c0_5, %c0_6] : memref<1024x128xf32, #tpu.memory_space<vmem>>, vector<1024x128xf32>
    %cst_7 = arith.constant dense<0.000000e+00> : vector<8x128xf32>
    %7 = tpu.matmul %5, %6, %cst_7 {dimension_numbers = #tpu.dot_dimension_numbers<[1], [0], [0], [1], [0, 0, 1, 1], [], []>} : vector<8x1024xf32>, vector<1024x128xf32>, vector<8x128xf32> -> vector<8x128xf32>
    %c0_8 = arith.constant 0 : index
    %c0_9 = arith.constant 0 : index
    %8 = vector.load %arg5[%c0_8, %c0_9] : memref<1x128xf32, #tpu.memory_space<vmem>>, vector<1x128xf32>
    %9 = vector.broadcast %8 : vector<1x128xf32> to vector<8x128xf32>
    %10 = arith.addf %7, %9 : vector<8x128xf32>
    %11 = arith.truncf %10 : vector<8x128xf32> to vector<8x128xbf16>
    %c0_10 = arith.constant 0 : index
    %c0_11 = arith.constant 0 : index
    %12 = vector.load %arg6[%c0_10, %c0_11] : memref<128x128xbf16, #tpu.memory_space<vmem>>, vector<128x128xbf16>
    %cst_12 = arith.constant dense<0.000000e+00> : vector<8x128xf32>
    %13 = tpu.matmul %11, %12, %cst_12 {dimension_numbers = #tpu.dot_dimension_numbers<[1], [0], [0], [1], [0, 0, 1, 1], [], []>} : vector<8x128xbf16>, vector<128x128xbf16>, vector<8x128xf32> -> vector<8x128xf32>
    %c0_13 = arith.constant 0 : index
    %c0_14 = arith.constant 0 : index
    %14 = vector.load %arg7[%c0_13, %c0_14] : memref<1x128xf32, #tpu.memory_space<vmem>>, vector<1x128xf32>
    %15 = vector.broadcast %14 : vector<1x128xf32> to vector<8x128xf32>
    %16 = arith.addf %13, %15 : vector<8x128xf32>
    %cst_15 = arith.constant 0.000000e+00 : f32
    %17 = vector.broadcast %cst_15 : f32 to vector<8x128xf32>
    %18 = arith.maximumf %16, %17 : vector<8x128xf32>
    %19 = arith.truncf %18 : vector<8x128xf32> to vector<8x128xbf16>
    %c0_16 = arith.constant 0 : index
    %c0_17 = arith.constant 0 : index
    %20 = vector.load %arg8[%c0_16, %c0_17] : memref<128x128xbf16, #tpu.memory_space<vmem>>, vector<128x128xbf16>
    %cst_18 = arith.constant dense<0.000000e+00> : vector<8x128xf32>
    %21 = tpu.matmul %19, %20, %cst_18 {dimension_numbers = #tpu.dot_dimension_numbers<[1], [0], [0], [1], [0, 0, 1, 1], [], []>} : vector<8x128xbf16>, vector<128x128xbf16>, vector<8x128xf32> -> vector<8x128xf32>
    %c0_19 = arith.constant 0 : index
    %c0_20 = arith.constant 0 : index
    %22 = vector.load %arg9[%c0_19, %c0_20] : memref<1x128xf32, #tpu.memory_space<vmem>>, vector<1x128xf32>
    %23 = vector.broadcast %22 : vector<1x128xf32> to vector<8x128xf32>
    %24 = arith.addf %21, %23 : vector<8x128xf32>
    %cst_21 = arith.constant 0.000000e+00 : f32
    %25 = vector.broadcast %cst_21 : f32 to vector<8x128xf32>
    %26 = arith.maximumf %24, %25 : vector<8x128xf32>
    %27 = arith.truncf %26 : vector<8x128xf32> to vector<8x128xbf16>
    %c0_22 = arith.constant 0 : index
    %c0_23 = arith.constant 0 : index
    %28 = vector.load %arg10[%c0_22, %c0_23] : memref<128x128xbf16, #tpu.memory_space<vmem>>, vector<128x128xbf16>
    %cst_24 = arith.constant dense<0.000000e+00> : vector<8x128xf32>
    %29 = tpu.matmul %27, %28, %cst_24 {dimension_numbers = #tpu.dot_dimension_numbers<[1], [0], [0], [1], [0, 0, 1, 1], [], []>} : vector<8x128xbf16>, vector<128x128xbf16>, vector<8x128xf32> -> vector<8x128xf32>
    %c0_25 = arith.constant 0 : index
    %c0_26 = arith.constant 0 : index
    %30 = memref.load %arg11[%c0_25, %c0_26] : memref<1x1xf32, #tpu.memory_space<smem>>
    %31 = vector.broadcast %30 : f32 to vector<8x128xf32>
    %32 = arith.addf %29, %31 : vector<8x128xf32>
    %cst_27 = arith.constant 0.000000e+00 : f32
    %33 = vector.broadcast %cst_27 : f32 to vector<8x128xf32>
    %34 = arith.subf %33, %32 : vector<8x128xf32>
    %35 = math.exp %34 : vector<8x128xf32>
    %cst_28 = arith.constant 1.000000e+00 : f32
    %36 = vector.broadcast %cst_28 : f32 to vector<8x128xf32>
    %37 = arith.addf %36, %35 : vector<8x128xf32>
    %38 = tpu.reciprocal %37 {approx = true} : vector<8x128xf32> -> vector<8x128xf32>
    %cst_29 = arith.constant 4.60517025 : f32
    %39 = vector.broadcast %cst_29 : f32 to vector<8x128xf32>
    %40 = arith.mulf %39, %38 : vector<8x128xf32>
    %cst_30 = arith.constant -9.21034049 : f32
    %41 = vector.broadcast %cst_30 : f32 to vector<8x128xf32>
    %42 = arith.addf %41, %40 : vector<8x128xf32>
    %43 = math.exp %42 : vector<8x128xf32>
    %c0_31 = arith.constant 0 : index
    %c0_32 = arith.constant 0 : index
    %44 = vector.load %arg12[%c0_31, %c0_32] : memref<8x128xf32, #tpu.memory_space<vmem>>, vector<8x128xf32>
    tpu.vector_store %arg12[%c0_31, %c0_32], %43 {strides = array<i32>} : memref<8x128xf32, #tpu.memory_space<vmem>>, vector<8x128xf32>,
    return
  }
  func.func @transform_0(%arg0: i32) -> (i32, i32) {
    %c0_i32 = arith.constant 0 : i32
    %c0_i32_0 = arith.constant 0 : i32
    return %arg0, %c0_i32 : i32, i32
  }
  func.func @transform_1(%arg0: i32) -> (i32, i32) {
    %c0_i32 = arith.constant 0 : i32
    %c0_i32_0 = arith.constant 0 : i32
    %c0_i32_1 = arith.constant 0 : i32
    return %c0_i32, %c0_i32_0 : i32, i32
  }
  func.func @transform_2(%arg0: i32) -> (i32, i32) {
    %c0_i32 = arith.constant 0 : i32
    %c0_i32_0 = arith.constant 0 : i32
    %c0_i32_1 = arith.constant 0 : i32
    return %c0_i32, %c0_i32_0 : i32, i32
  }
  func.func @transform_3(%arg0: i32) -> (i32, i32) {
    %c0_i32 = arith.constant 0 : i32
    %c0_i32_0 = arith.constant 0 : i32
    %c0_i32_1 = arith.constant 0 : i32
    return %c0_i32, %c0_i32_0 : i32, i32
  }
  func.func @transform_4(%arg0: i32) -> (i32, i32) {
    %c0_i32 = arith.constant 0 : i32
    %c0_i32_0 = arith.constant 0 : i32
    %c0_i32_1 = arith.constant 0 : i32
    return %c0_i32, %c0_i32_0 : i32, i32
  }
  func.func @transform_5(%arg0: i32) -> (i32, i32) {
    %c0_i32 = arith.constant 0 : i32
    %c0_i32_0 = arith.constant 0 : i32
    %c0_i32_1 = arith.constant 0 : i32
    return %c0_i32, %c0_i32_0 : i32, i32
  }
  func.func @transform_6(%arg0: i32) -> (i32, i32) {
    %c0_i32 = arith.constant 0 : i32
    %c0_i32_0 = arith.constant 0 : i32
    %c0_i32_1 = arith.constant 0 : i32
    return %c0_i32, %c0_i32_0 : i32, i32
  }
  func.func @transform_7(%arg0: i32) -> (i32, i32) {
    %c0_i32 = arith.constant 0 : i32
    %c0_i32_0 = arith.constant 0 : i32
    %c0_i32_1 = arith.constant 0 : i32
    return %c0_i32, %c0_i32_0 : i32, i32
  }
  func.func @transform_8(%arg0: i32) -> (i32, i32) {
    %c0_i32 = arith.constant 0 : i32
    %c0_i32_0 = arith.constant 0 : i32
    %c0_i32_1 = arith.constant 0 : i32
    return %c0_i32, %c0_i32_0 : i32, i32
  }
  func.func @transform_9(%arg0: i32) -> (i32, i32) {
    %c0_i32 = arith.constant 0 : i32
    %c0_i32_0 = arith.constant 0 : i32
    %c0_i32_1 = arith.constant 0 : i32
    return %c0_i32, %c0_i32_0 : i32, i32
  }
  func.func @transform_10(%arg0: i32) -> (i32, i32) {
    %c0_i32 = arith.constant 0 : i32
    %c0_i32_0 = arith.constant 0 : i32
    %c0_i32_1 = arith.constant 0 : i32
    return %c0_i32, %c0_i32_0 : i32, i32
  }
  func.func @transform_11(%arg0: i32) -> (i32, i32) {
    %c0_i32 = arith.constant 0 : i32
    %c0_i32_0 = arith.constant 0 : i32
    return %arg0, %c0_i32 : i32, i32
  }
}

</mosaic_0001>

<llo_original>
// kernel: sigma_net_forward.1
$region0: #{sigma_net_forward.1}
  #allocation0 [shape = 'u32[]', space=smem, size = 0x4, offset = 0x4, fixed_abs, tag = 'smem constant byte address 0x4 - core index']
  #allocation1 [shape = 'u32[72,128]{1,0:T(1,128)}', space=vmem, size = 0x9000, scoped, tag = 'internal scratch']
  #allocation2 [shape = 'f32[1,1]{1,0:T(1,128)S(6)}', space=smem, size = 0x200, scoped, tag = 'scoped memory for sigma_net_forward.1']
  %s0 = inlined_call_operand.vmem [shape: f32[8,16], index: 0, kind: input, shape index: {}]
  %s1 = inlined_call_operand.vmem [shape: f32[16,1024], index: 1, kind: input, shape index: {}]
  %s2 = inlined_call_operand.vmem [shape: f32[1,1024], index: 2, kind: input, shape index: {}]
  %s3 = inlined_call_operand.vmem [shape: f32[1024,128], index: 3, kind: input, shape index: {}]
  %s4 = inlined_call_operand.vmem [shape: f32[1,128], index: 4, kind: input, shape index: {}]
  %s5 = inlined_call_operand.vmem [shape: bf16[128,128], index: 5, kind: input, shape index: {}]
  %s6 = inlined_call_operand.vmem [shape: f32[1,128], index: 6, kind: input, shape index: {}]
  %s7 = inlined_call_operand.vmem [shape: bf16[128,128], index: 7, kind: input, shape index: {}]
  %s8 = inlined_call_operand.vmem [shape: f32[1,128], index: 8, kind: input, shape index: {}]
  %s9 = inlined_call_operand.vmem [shape: bf16[128,128], index: 9, kind: input, shape index: {}]
  %s10 = inlined_call_operand.<no memory space> [shape: f32[1,1], index: 10, kind: input, shape index: {}]
  %s11 = inlined_call_operand.vmem [shape: f32[8,128], index: 11, kind: output, shape index: {}]
  %s12 = sld [smem:[#allocation0]]
  $region54: #{sigma_net_forward.1} parent=0
    _
  %s14 = ssub.s32 1, %s12
  %s15 = scalar_select 0, %s14, %s12
  %16 = sst [smem:[#allocation2]] %s10
  // Predicated region
  $region2: #{sigma_net_forward.1} parent=0 // pred_check
    _
  $region3: #{sigma_net_forward.1} parent=0 // pred_check_branch
    %18 = sbr.rel (0) target = $region5
  $region4: #{sigma_net_forward.1} parent=0 // pred_region
    _
  $region5: #{sigma_net_forward.1} parent=0 // pred_fallthru
    _
  // Predicated region
  $region6: #{sigma_net_forward.1} parent=0 // pred_check
    _
  $region7: #{sigma_net_forward.1} parent=0 // pred_check_branch
    %20 = sbr.rel (0) target = $region9
  $region8: #{sigma_net_forward.1} parent=0 // pred_region
    _
  $region9: #{sigma_net_forward.1} parent=0 // pred_fallthru
    _
  // Predicated region
  $region10: #{sigma_net_forward.1} parent=0 // pred_check
    _
  $region11: #{sigma_net_forward.1} parent=0 // pred_check_branch
    %22 = sbr.rel (0) target = $region13
  $region12: #{sigma_net_forward.1} parent=0 // pred_region
    _
  $region13: #{sigma_net_forward.1} parent=0 // pred_fallthru
    _
  // Predicated region
  $region14: #{sigma_net_forward.1} parent=0 // pred_check
    _
  $region15: #{sigma_net_forward.1} parent=0 // pred_check_branch
    %24 = sbr.rel (0) target = $region17
  $region16: #{sigma_net_forward.1} parent=0 // pred_region
    _
  $region17: #{sigma_net_forward.1} parent=0 // pred_fallthru
    _
  // Predicated region
  $region18: #{sigma_net_forward.1} parent=0 // pred_check
    _
  $region19: #{sigma_net_forward.1} parent=0 // pred_check_branch
    %26 = sbr.rel (0) target = $region21
  $region20: #{sigma_net_forward.1} parent=0 // pred_region
    _
  $region21: #{sigma_net_forward.1} parent=0 // pred_fallthru
    _
  // Predicated region
  $region22: #{sigma_net_forward.1} parent=0 // pred_check
    _
  $region23: #{sigma_net_forward.1} parent=0 // pred_check_branch
    %28 = sbr.rel (0) target = $region25
  $region24: #{sigma_net_forward.1} parent=0 // pred_region
    _
  $region25: #{sigma_net_forward.1} parent=0 // pred_fallthru
    _
  // Predicated region
  $region26: #{sigma_net_forward.1} parent=0 // pred_check
    _
  $region27: #{sigma_net_forward.1} parent=0 // pred_check_branch
    %30 = sbr.rel (0) target = $region29
  $region28: #{sigma_net_forward.1} parent=0 // pred_region
    _
  $region29: #{sigma_net_forward.1} parent=0 // pred_fallthru
    _
  // Predicated region
  $region30: #{sigma_net_forward.1} parent=0 // pred_check
    _
  $region31: #{sigma_net_forward.1} parent=0 // pred_check_branch
    %32 = sbr.rel (0) target = $region33
  $region32: #{sigma_net_forward.1} parent=0 // pred_region
    _
  $region33: #{sigma_net_forward.1} parent=0 // pred_fallthru
    _
  // Predicated region
  $region34: #{sigma_net_forward.1} parent=0 // pred_check
    _
  $region35: #{sigma_net_forward.1} parent=0 // pred_check_branch
    %34 = sbr.rel (0) target = $region37
  $region36: #{sigma_net_forward.1} parent=0 // pred_region
    _
  $region37: #{sigma_net_forward.1} parent=0 // pred_fallthru
    _
  // Predicated region
  $region38: #{sigma_net_forward.1} parent=0 // pred_check
    _
  $region39: #{sigma_net_forward.1} parent=0 // pred_check_branch
    %36 = sbr.rel (0) target = $region41
  $region40: #{sigma_net_forward.1} parent=0 // pred_region
    _
  $region41: #{sigma_net_forward.1} parent=0 // pred_fallthru
    _
  // Predicated region
  $region42: #{sigma_net_forward.1} parent=0 // pred_check
    _
  $region43: #{sigma_net_forward.1} parent=0 // pred_check_branch
    %38 = sbr.rel (0) target = $region45
  $region44: #{sigma_net_forward.1} parent=0 // pred_region
    _
  $region45: #{sigma_net_forward.1} parent=0 // pred_fallthru
    _
  %v39 = vld [vmem:[%s0] sm:$0xff]
  %v40 = vld [vmem:[%s1] sm:$0xff]
  %v41 = vld [vmem:[%s1 + $0x8] sm:$0xff]
  %v42 = vld [vmem:[%s1 + $0x10] sm:$0xff]
  %v43 = vld [vmem:[%s1 + $0x18] sm:$0xff]
  %v44 = vld [vmem:[%s1 + $0x20] sm:$0xff]
  %v45 = vld [vmem:[%s1 + $0x28] sm:$0xff]
  %v46 = vld [vmem:[%s1 + $0x30] sm:$0xff]
  %v47 = vld [vmem:[%s1 + $0x38] sm:$0xff]
  %v48 = vld [vmem:[%s1 + $0x40] sm:$0xff]
  %v49 = vld [vmem:[%s1 + $0x48] sm:$0xff]
  %v50 = vld [vmem:[%s1 + $0x50] sm:$0xff]
  %v51 = vld [vmem:[%s1 + $0x58] sm:$0xff]
  %v52 = vld [vmem:[%s1 + $0x60] sm:$0xff]
  %v53 = vld [vmem:[%s1 + $0x68] sm:$0xff]
  %v54 = vld [vmem:[%s1 + $0x70] sm:$0xff]
  %v55 = vld [vmem:[%s1 + $0x78] sm:$0xff]
  %v56 = vld [vmem:[%s2] sm:$0xff]
  %v58 = vperm.slane %v56, 0
  %v59 = vperm.slane %v56, 1
  %v60 = vperm.slane %v56, 2
  %v61 = vperm.slane %v56, 3
  %v62 = vperm.slane %v56, 4
  %v63 = vperm.slane %v56, 5
  %v64 = vperm.slane %v56, 6
  %v65 = vperm.slane %v56, 7
  %vm74 = vcmask 130048
  %v76 = vsel %vm74, %v39, 0
  %78 = vmatpush.msra.mxu0 0.0
  %79 = vmatpush.msra.mxu0 0.0
  %80 = vmatpush.msra.mxu0 0.0
  %81 = vmatpush.msra.mxu0 0.0
  %82 = vmatpush.msra.mxu0 0.0
  %83 = vmatpush.msra.mxu0 0.0
  %84 = vmatpush.msra.mxu0 0.0
  %85 = vmatpush.msra.mxu0 0.0
  %86 = vmatpush.msra.mxu0 0.0
  %87 = vmatpush.msra.mxu0 0.0
  %88 = vmatpush.msra.mxu0 0.0
  %89 = vmatpush.msra.mxu0 0.0
  %90 = vmatpush.msra.mxu0 0.0
  %91 = vmatpush.msra.mxu0 0.0
  %92 = vmatpush.msra.mxu0 %v48
  %93 = vmatpush.msra.mxu0 %v40
  %94 = vmatmul.f32.gmra.mxu0 %v76
  %v95 = vpop.f32.mrf.mxu0
  %v96 = vadd.f32 %v58, %v95
  %97 = vdwg.mxu0
  %98 = vmatpush.msra.mxu0 0.0
  %99 = vmatpush.msra.mxu0 0.0
  %100 = vmatpush.msra.mxu0 0.0
  %101 = vmatpush.msra.mxu0 0.0
  %102 = vmatpush.msra.mxu0 0.0
  %103 = vmatpush.msra.mxu0 0.0
  %104 = vmatpush.msra.mxu0 0.0
  %105 = vmatpush.msra.mxu0 0.0
  %106 = vmatpush.msra.mxu0 0.0
  %107 = vmatpush.msra.mxu0 0.0
  %108 = vmatpush.msra.mxu0 0.0
  %109 = vmatpush.msra.mxu0 0.0
  %110 = vmatpush.msra.mxu0 0.0
  %111 = vmatpush.msra.mxu0 0.0
  %112 = vmatpush.msra.mxu0 %v49
  %113 = vmatpush.msra.mxu0 %v41
  %114 = vmatmul.f32.gmra.mxu0 %v76
  %v115 = vpop.f32.mrf.mxu0
  %v116 = vadd.f32 %v59, %v115
  %117 = vdwg.mxu0
  %118 = vmatpush.msra.mxu0 0.0
  %119 = vmatpush.msra.mxu0 0.0
  %120 = vmatpush.msra.mxu0 0.0
  %121 = vmatpush.msra.mxu0 0.0
  %122 = vmatpush.msra.mxu0 0.0
  %123 = vmatpush.msra.mxu0 0.0
  %124 = vmatpush.msra.mxu0 0.0
  %125 = vmatpush.msra.mxu0 0.0
  %126 = vmatpush.msra.mxu0 0.0
  %127 = vmatpush.msra.mxu0 0.0
  %128 = vmatpush.msra.mxu0 0.0
  %129 = vmatpush.msra.mxu0 0.0
  %130 = vmatpush.msra.mxu0 0.0
  %131 = vmatpush.msra.mxu0 0.0
  %132 = vmatpush.msra.mxu0 %v50
  %133 = vmatpush.msra.mxu0 %v42
  %134 = vmatmul.f32.gmra.mxu0 %v76
  %v135 = vpop.f32.mrf.mxu0
  %v136 = vadd.f32 %v60, %v135
  %137 = vdwg.mxu0
  %138 = vmatpush.msra.mxu0 0.0
  %139 = vmatpush.msra.mxu0 0.0
  %140 = vmatpush.msra.mxu0 0.0
  %141 = vmatpush.msra.mxu0 0.0
  %142 = vmatpush.msra.mxu0 0.0
  %143 = vmatpush.msra.mxu0 0.0
  %144 = vmatpush.msra.mxu0 0.0
  %145 = vmatpush.msra.mxu0 0.0
  %146 = vmatpush.msra.mxu0 0.0
  %147 = vmatpush.msra.mxu0 0.0
  %148 = vmatpush.msra.mxu0 0.0
  %149 = vmatpush.msra.mxu0 0.0
  %150 = vmatpush.msra.mxu0 0.0
  %151 = vmatpush.msra.mxu0 0.0
  %152 = vmatpush.msra.mxu0 %v51
  %153 = vmatpush.msra.mxu0 %v43
  %154 = vmatmul.f32.gmra.mxu0 %v76
  %v155 = vpop.f32.mrf.mxu0
  %v156 = vadd.f32 %v61, %v155
  %157 = vdwg.mxu0
  %158 = vmatpush.msra.mxu0 0.0
  %159 = vmatpush.msra.mxu0 0.0
  %160 = vmatpush.msra.mxu0 0.0
  %161 = vmatpush.msra.mxu0 0.0
  %162 = vmatpush.msra.mxu0 0.0
  %163 = vmatpush.msra.mxu0 0.0
  %164 = vmatpush.msra.mxu0 0.0
  %165 = vmatpush.msra.mxu0 0.0
  %166 = vmatpush.msra.mxu0 0.0
  %167 = vmatpush.msra.mxu0 0.0
  %168 = vmatpush.msra.mxu0 0.0
  %169 = vmatpush.msra.mxu0 0.0
  %170 = vmatpush.msra.mxu0 0.0
  %171 = vmatpush.msra.mxu0 0.0
  %172 = vmatpush.msra.mxu0 %v52
  %173 = vmatpush.msra.mxu0 %v44
  %174 = vmatmul.f32.gmra.mxu0 %v76
  %v175 = vpop.f32.mrf.mxu0
  %v176 = vadd.f32 %v62, %v175
  %177 = vdwg.mxu0
  %178 = vmatpush.msra.mxu0 0.0
  %179 = vmatpush.msra.mxu0 0.0
  %180 = vmatpush.msra.mxu0 0.0
  %181 = vmatpush.msra.mxu0 0.0
  %182 = vmatpush.msra.mxu0 0.0
  %183 = vmatpush.msra.mxu0 0.0
  %184 = vmatpush.msra.mxu0 0.0
  %185 = vmatpush.msra.mxu0 0.0
  %186 = vmatpush.msra.mxu0 0.0
  %187 = vmatpush.msra.mxu0 0.0
  %188 = vmatpush.msra.mxu0 0.0
  %189 = vmatpush.msra.mxu0 0.0
  %190 = vmatpush.msra.mxu0 0.0
  %191 = vmatpush.msra.mxu0 0.0
  %192 = vmatpush.msra.mxu0 %v53
  %193 = vmatpush.msra.mxu0 %v45
  %194 = vmatmul.f32.gmra.mxu0 %v76
  %v195 = vpop.f32.mrf.mxu0
  %v196 = vadd.f32 %v63, %v195
  %197 = vdwg.mxu0
  %198 = vmatpush.msra.mxu0 0.0
  %199 = vmatpush.msra.mxu0 0.0
  %200 = vmatpush.msra.mxu0 0.0
  %201 = vmatpush.msra.mxu0 0.0
  %202 = vmatpush.msra.mxu0 0.0
  %203 = vmatpush.msra.mxu0 0.0
  %204 = vmatpush.msra.mxu0 0.0
  %205 = vmatpush.msra.mxu0 0.0
  %206 = vmatpush.msra.mxu0 0.0
  %207 = vmatpush.msra.mxu0 0.0
  %208 = vmatpush.msra.mxu0 0.0
  %209 = vmatpush.msra.mxu0 0.0
  %210 = vmatpush.msra.mxu0 0.0
  %211 = vmatpush.msra.mxu0 0.0
  %212 = vmatpush.msra.mxu0 %v54
  %213 = vmatpush.msra.mxu0 %v46
  %214 = vmatmul.f32.gmra.mxu0 %v76
  %v215 = vpop.f32.mrf.mxu0
  %v216 = vadd.f32 %v64, %v215
  %217 = vdwg.mxu0
  %218 = vmatpush.msra.mxu0 0.0
  %219 = vmatpush.msra.mxu0 0.0
  %220 = vmatpush.msra.mxu0 0.0
  %221 = vmatpush.msra.mxu0 0.0
  %222 = vmatpush.msra.mxu0 0.0
  %223 = vmatpush.msra.mxu0 0.0
  %224 = vmatpush.msra.mxu0 0.0
  %225 = vmatpush.msra.mxu0 0.0
  %226 = vmatpush.msra.mxu0 0.0
  %227 = vmatpush.msra.mxu0 0.0
  %228 = vmatpush.msra.mxu0 0.0
  %229 = vmatpush.msra.mxu0 0.0
  %230 = vmatpush.msra.mxu0 0.0
  %231 = vmatpush.msra.mxu0 0.0
  %232 = vmatpush.msra.mxu0 %v55
  %233 = vmatpush.msra.mxu0 %v47
  %234 = vmatmul.f32.gmra.mxu0 %v76
  %v235 = vpop.f32.mrf.mxu0
  %v236 = vadd.f32 %v65, %v235
  %237 = vdwg.mxu0
  %v238 = vld [vmem:[%s3] sm:$0xff]
  %v239 = vld [vmem:[%s3 + $0x8] sm:$0xff]
  %v240 = vld [vmem:[%s3 + $0x10] sm:$0xff]
  %v241 = vld [vmem:[%s3 + $0x18] sm:$0xff]
  %v242 = vld [vmem:[%s3 + $0x20] sm:$0xff]
  %v243 = vld [vmem:[%s3 + $0x28] sm:$0xff]
  %v244 = vld [vmem:[%s3 + $0x30] sm:$0xff]
  %v245 = vld [vmem:[%s3 + $0x38] sm:$0xff]
  %v246 = vld [vmem:[%s3 + $0x40] sm:$0xff]
  %v247 = vld [vmem:[%s3 + $0x48] sm:$0xff]
  %v248 = vld [vmem:[%s3 + $0x50] sm:$0xff]
  %v249 = vld [vmem:[%s3 + $0x58] sm:$0xff]
  %v250 = vld [vmem:[%s3 + $0x60] sm:$0xff]
  %v251 = vld [vmem:[%s3 + $0x68] sm:$0xff]
  %v252 = vld [vmem:[%s3 + $0x70] sm:$0xff]
  %v253 = vld [vmem:[%s3 + $0x78] sm:$0xff]
  %v254 = vld [vmem:[%s3 + $0x80] sm:$0xff]
  %v255 = vld [vmem:[%s3 + $0x88] sm:$0xff]
  %v256 = vld [vmem:[%s3 + $0x90] sm:$0xff]
  %v257 = vld [vmem:[%s3 + $0x98] sm:$0xff]
  %v258 = vld [vmem:[%s3 + $0xa0] sm:$0xff]
  %v259 = vld [vmem:[%s3 + $0xa8] sm:$0xff]
  %v260 = vld [vmem:[%s3 + $0xb0] sm:$0xff]
  %v261 = vld [vmem:[%s3 + $0xb8] sm:$0xff]
  %v262 = vld [vmem:[%s3 + $0xc0] sm:$0xff]
  %v263 = vld [vmem:[%s3 + $0xc8] sm:$0xff]
  %v264 = vld [vmem:[%s3 + $0xd0] sm:$0xff]
  %v265 = vld [vmem:[%s3 + $0xd8] sm:$0xff]
  %v266 = vld [vmem:[%s3 + $0xe0] sm:$0xff]
  %v267 = vld [vmem:[%s3 + $0xe8] sm:$0xff]
  %v268 = vld [vmem:[%s3 + $0xf0] sm:$0xff]
  %v269 = vld [vmem:[%s3 + $0xf8] sm:$0xff]
  %v270 = vld [vmem:[%s3 + $0x100] sm:$0xff]
  %v271 = vld [vmem:[%s3 + $0x108] sm:$0xff]
  %v272 = vld [vmem:[%s3 + $0x110] sm:$0xff]
  %v273 = vld [vmem:[%s3 + $0x118] sm:$0xff]
  %v274 = vld [vmem:[%s3 + $0x120] sm:$0xff]
  %v275 = vld [vmem:[%s3 + $0x128] sm:$0xff]
  %v276 = vld [vmem:[%s3 + $0x130] sm:$0xff]
  %v277 = vld [vmem:[%s3 + $0x138] sm:$0xff]
  %v278 = vld [vmem:[%s3 + $0x140] sm:$0xff]
  %v279 = vld [vmem:[%s3 + $0x148] sm:$0xff]
  %v280 = vld [vmem:[%s3 + $0x150] sm:$0xff]
  %v281 = vld [vmem:[%s3 + $0x158] sm:$0xff]
  %v282 = vld [vmem:[%s3 + $0x160] sm:$0xff]
  %v283 = vld [vmem:[%s3 + $0x168] sm:$0xff]
  %v284 = vld [vmem:[%s3 + $0x170] sm:$0xff]
  %v285 = vld [vmem:[%s3 + $0x178] sm:$0xff]
  %v286 = vld [vmem:[%s3 + $0x180] sm:$0xff]
  %v287 = vld [vmem:[%s3 + $0x188] sm:$0xff]
  %v288 = vld [vmem:[%s3 + $0x190] sm:$0xff]
  %v289 = vld [vmem:[%s3 + $0x198] sm:$0xff]
  %v290 = vld [vmem:[%s3 + $0x1a0] sm:$0xff]
  %v291 = vld [vmem:[%s3 + $0x1a8] sm:$0xff]
  %v292 = vld [vmem:[%s3 + $0x1b0] sm:$0xff]
  %v293 = vld [vmem:[%s3 + $0x1b8] sm:$0xff]
  %v294 = vld [vmem:[%s3 + $0x1c0] sm:$0xff]
  %v295 = vld [vmem:[%s3 + $0x1c8] sm:$0xff]
  %v296 = vld [vmem:[%s3 + $0x1d0] sm:$0xff]
  %v297 = vld [vmem:[%s3 + $0x1d8] sm:$0xff]
  %v298 = vld [vmem:[%s3 + $0x1e0] sm:$0xff]
  %v299 = vld [vmem:[%s3 + $0x1e8] sm:$0xff]
  %v300 = vld [vmem:[%s3 + $0x1f0] sm:$0xff]
  %v301 = vld [vmem:[%s3 + $0x1f8] sm:$0xff]
  %v302 = vld [vmem:[%s3 + $0x200] sm:$0xff]
  %v303 = vld [vmem:[%s3 + $0x208] sm:$0xff]
  %v304 = vld [vmem:[%s3 + $0x210] sm:$0xff]
  %v305 = vld [vmem:[%s3 + $0x218] sm:$0xff]
  %v306 = vld [vmem:[%s3 + $0x220] sm:$0xff]
  %v307 = vld [vmem:[%s3 + $0x228] sm:$0xff]
  %v308 = vld [vmem:[%s3 + $0x230] sm:$0xff]
  %v309 = vld [vmem:[%s3 + $0x238] sm:$0xff]
  %v310 = vld [vmem:[%s3 + $0x240] sm:$0xff]
  %v311 = vld [vmem:[%s3 + $0x248] sm:$0xff]
  %v312 = vld [vmem:[%s3 + $0x250] sm:$0xff]
  %v313 = vld [vmem:[%s3 + $0x258] sm:$0xff]
  %v314 = vld [vmem:[%s3 + $0x260] sm:$0xff]
  %v315 = vld [vmem:[%s3 + $0x268] sm:$0xff]
  %v316 = vld [vmem:[%s3 + $0x270] sm:$0xff]
  %v317 = vld [vmem:[%s3 + $0x278] sm:$0xff]
  %v318 = vld [vmem:[%s3 + $0x280] sm:$0xff]
  %v319 = vld [vmem:[%s3 + $0x288] sm:$0xff]
  %v320 = vld [vmem:[%s3 + $0x290] sm:$0xff]
  %v321 = vld [vmem:[%s3 + $0x298] sm:$0xff]
  %v322 = vld [vmem:[%s3 + $0x2a0] sm:$0xff]
  %v323 = vld [vmem:[%s3 + $0x2a8] sm:$0xff]
  %v324 = vld [vmem:[%s3 + $0x2b0] sm:$0xff]
  %v325 = vld [vmem:[%s3 + $0x2b8] sm:$0xff]
  %v326 = vld [vmem:[%s3 + $0x2c0] sm:$0xff]
  %v327 = vld [vmem:[%s3 + $0x2c8] sm:$0xff]
  %v328 = vld [vmem:[%s3 + $0x2d0] sm:$0xff]
  %v329 = vld [vmem:[%s3 + $0x2d8] sm:$0xff]
  %v330 = vld [vmem:[%s3 + $0x2e0] sm:$0xff]
  %v331 = vld [vmem:[%s3 + $0x2e8] sm:$0xff]
  %v332 = vld [vmem:[%s3 + $0x2f0] sm:$0xff]
  %v333 = vld [vmem:[%s3 + $0x2f8] sm:$0xff]
  %v334 = vld [vmem:[%s3 + $0x300] sm:$0xff]
  %v335 = vld [vmem:[%s3 + $0x308] sm:$0xff]
  %v336 = vld [vmem:[%s3 + $0x310] sm:$0xff]
  %v337 = vld [vmem:[%s3 + $0x318] sm:$0xff]
  %v338 = vld [vmem:[%s3 + $0x320] sm:$0xff]
  %v339 = vld [vmem:[%s3 + $0x328] sm:$0xff]
  %v340 = vld [vmem:[%s3 + $0x330] sm:$0xff]
  %v341 = vld [vmem:[%s3 + $0x338] sm:$0xff]
  %v342 = vld [vmem:[%s3 + $0x340] sm:$0xff]
  %v343 = vld [vmem:[%s3 + $0x348] sm:$0xff]
  %v344 = vld [vmem:[%s3 + $0x350] sm:$0xff]
  %v345 = vld [vmem:[%s3 + $0x358] sm:$0xff]
  %v346 = vld [vmem:[%s3 + $0x360] sm:$0xff]
  %v347 = vld [vmem:[%s3 + $0x368] sm:$0xff]
  %v348 = vld [vmem:[%s3 + $0x370] sm:$0xff]
  %v349 = vld [vmem:[%s3 + $0x378] sm:$0xff]
  %v350 = vld [vmem:[%s3 + $0x380] sm:$0xff]
  %v351 = vld [vmem:[%s3 + $0x388] sm:$0xff]
  %v352 = vld [vmem:[%s3 + $0x390] sm:$0xff]
  %v353 = vld [vmem:[%s3 + $0x398] sm:$0xff]
  %v354 = vld [vmem:[%s3 + $0x3a0] sm:$0xff]
  %v355 = vld [vmem:[%s3 + $0x3a8] sm:$0xff]
  %v356 = vld [vmem:[%s3 + $0x3b0] sm:$0xff]
  %v357 = vld [vmem:[%s3 + $0x3b8] sm:$0xff]
  %v358 = vld [vmem:[%s3 + $0x3c0] sm:$0xff]
  %v359 = vld [vmem:[%s3 + $0x3c8] sm:$0xff]
  %v360 = vld [vmem:[%s3 + $0x3d0] sm:$0xff]
  %v361 = vld [vmem:[%s3 + $0x3d8] sm:$0xff]
  %v362 = vld [vmem:[%s3 + $0x3e0] sm:$0xff]
  %v363 = vld [vmem:[%s3 + $0x3e8] sm:$0xff]
  %v364 = vld [vmem:[%s3 + $0x3f0] sm:$0xff]
  %v365 = vld [vmem:[%s3 + $0x3f8] sm:$0xff]
  %v366 = vld [vmem:[%s4] sm:$0x1]
  %v368 = vperm.slane %v366, 0
  %370 = vmatpush.msra.mxu0 %v253
  %371 = vmatpush.msra.mxu0 %v252
  %372 = vmatpush.msra.mxu0 %v251
  %373 = vmatpush.msra.mxu0 %v250
  %374 = vmatpush.msra.mxu0 %v249
  %375 = vmatpush.msra.mxu0 %v248
  %376 = vmatpush.msra.mxu0 %v247
  %377 = vmatpush.msra.mxu0 %v246
  %378 = vmatpush.msra.mxu0 %v245
  %379 = vmatpush.msra.mxu0 %v244
  %380 = vmatpush.msra.mxu0 %v243
  %381 = vmatpush.msra.mxu0 %v242
  %382 = vmatpush.msra.mxu0 %v241
  %383 = vmatpush.msra.mxu0 %v240
  %384 = vmatpush.msra.mxu0 %v239
  %385 = vmatpush.msra.mxu0 %v238
  %386 = vmatmul.f32.gmra.mxu0 %v96
  %v387 = vpop.f32.mrf.mxu0
  %v388 = vadd.f32 %v368, %v387
  %389 = vdwg.mxu0
  %390 = vmatpush.msra.mxu0 %v269
  %391 = vmatpush.msra.mxu0 %v268
  %392 = vmatpush.msra.mxu0 %v267
  %393 = vmatpush.msra.mxu0 %v266
  %394 = vmatpush.msra.mxu0 %v265
  %395 = vmatpush.msra.mxu0 %v264
  %396 = vmatpush.msra.mxu0 %v263
  %397 = vmatpush.msra.mxu0 %v262
  %398 = vmatpush.msra.mxu0 %v261
  %399 = vmatpush.msra.mxu0 %v260
  %400 = vmatpush.msra.mxu0 %v259
  %401 = vmatpush.msra.mxu0 %v258
  %402 = vmatpush.msra.mxu0 %v257
  %403 = vmatpush.msra.mxu0 %v256
  %404 = vmatpush.msra.mxu0 %v255
  %405 = vmatpush.msra.mxu0 %v254
  %406 = vmatmul.f32.gmra.mxu0 %v116
  %v407 = vpop.f32.mrf.mxu0
  %v408 = vadd.f32 %v388, %v407
  %409 = vdwg.mxu0
  %410 = vmatpush.msra.mxu0 %v285
  %411 = vmatpush.msra.mxu0 %v284
  %412 = vmatpush.msra.mxu0 %v283
  %413 = vmatpush.msra.mxu0 %v282
  %414 = vmatpush.msra.mxu0 %v281
  %415 = vmatpush.msra.mxu0 %v280
  %416 = vmatpush.msra.mxu0 %v279
  %417 = vmatpush.msra.mxu0 %v278
  %418 = vmatpush.msra.mxu0 %v277
  %419 = vmatpush.msra.mxu0 %v276
  %420 = vmatpush.msra.mxu0 %v275
  %421 = vmatpush.msra.mxu0 %v274
  %422 = vmatpush.msra.mxu0 %v273
  %423 = vmatpush.msra.mxu0 %v272
  %424 = vmatpush.msra.mxu0 %v271
  %425 = vmatpush.msra.mxu0 %v270
  %426 = vmatmul.f32.gmra.mxu0 %v136
  %v427 = vpop.f32.mrf.mxu0
  %v428 = vadd.f32 %v408, %v427
  %429 = vdwg.mxu0
  %430 = vmatpush.msra.mxu0 %v301
  %431 = vmatpush.msra.mxu0 %v300
  %432 = vmatpush.msra.mxu0 %v299
  %433 = vmatpush.msra.mxu0 %v298
  %434 = vmatpush.msra.mxu0 %v297
  %435 = vmatpush.msra.mxu0 %v296
  %436 = vmatpush.msra.mxu0 %v295
  %437 = vmatpush.msra.mxu0 %v294
  %438 = vmatpush.msra.mxu0 %v293
  %439 = vmatpush.msra.mxu0 %v292
  %440 = vmatpush.msra.mxu0 %v291
  %441 = vmatpush.msra.mxu0 %v290
  %442 = vmatpush.msra.mxu0 %v289
  %443 = vmatpush.msra.mxu0 %v288
  %444 = vmatpush.msra.mxu0 %v287
  %445 = vmatpush.msra.mxu0 %v286
  %446 = vmatmul.f32.gmra.mxu0 %v156
  %v447 = vpop.f32.mrf.mxu0
  %v448 = vadd.f32 %v428, %v447
  %449 = vdwg.mxu0
  %450 = vmatpush.msra.mxu0 %v317
  %451 = vmatpush.msra.mxu0 %v316
  %452 = vmatpush.msra.mxu0 %v315
  %453 = vmatpush.msra.mxu0 %v314
  %454 = vmatpush.msra.mxu0 %v313
  %455 = vmatpush.msra.mxu0 %v312
  %456 = vmatpush.msra.mxu0 %v311
  %457 = vmatpush.msra.mxu0 %v310
  %458 = vmatpush.msra.mxu0 %v309
  %459 = vmatpush.msra.mxu0 %v308
  %460 = vmatpush.msra.mxu0 %v307
  %461 = vmatpush.msra.mxu0 %v306
  %462 = vmatpush.msra.mxu0 %v305
  %463 = vmatpush.msra.mxu0 %v304
  %464 = vmatpush.msra.mxu0 %v303
  %465 = vmatpush.msra.mxu0 %v302
  %466 = vmatmul.f32.gmra.mxu0 %v176
  %v467 = vpop.f32.mrf.mxu0
  %v468 = vadd.f32 %v448, %v467
  %469 = vdwg.mxu0
  %470 = vmatpush.msra.mxu0 %v333
  %471 = vmatpush.msra.mxu0 %v332
  %472 = vmatpush.msra.mxu0 %v331
  %473 = vmatpush.msra.mxu0 %v330
  %474 = vmatpush.msra.mxu0 %v329
  %475 = vmatpush.msra.mxu0 %v328
  %476 = vmatpush.msra.mxu0 %v327
  %477 = vmatpush.msra.mxu0 %v326
  %478 = vmatpush.msra.mxu0 %v325
  %479 = vmatpush.msra.mxu0 %v324
  %480 = vmatpush.msra.mxu0 %v323
  %481 = vmatpush.msra.mxu0 %v322
  %482 = vmatpush.msra.mxu0 %v321
  %483 = vmatpush.msra.mxu0 %v320
  %484 = vmatpush.msra.mxu0 %v319
  %485 = vmatpush.msra.mxu0 %v318
  %486 = vmatmul.f32.gmra.mxu0 %v196
  %v487 = vpop.f32.mrf.mxu0
  %v488 = vadd.f32 %v468, %v487
  %489 = vdwg.mxu0
  %490 = vmatpush.msra.mxu0 %v349
  %491 = vmatpush.msra.mxu0 %v348
  %492 = vmatpush.msra.mxu0 %v347
  %493 = vmatpush.msra.mxu0 %v346
  %494 = vmatpush.msra.mxu0 %v345
  %495 = vmatpush.msra.mxu0 %v344
  %496 = vmatpush.msra.mxu0 %v343
  %497 = vmatpush.msra.mxu0 %v342
  %498 = vmatpush.msra.mxu0 %v341
  %499 = vmatpush.msra.mxu0 %v340
  %500 = vmatpush.msra.mxu0 %v339
  %501 = vmatpush.msra.mxu0 %v338
  %502 = vmatpush.msra.mxu0 %v337
  %503 = vmatpush.msra.mxu0 %v336
  %504 = vmatpush.msra.mxu0 %v335
  %505 = vmatpush.msra.mxu0 %v334
  %506 = vmatmul.f32.gmra.mxu0 %v216
  %v507 = vpop.f32.mrf.mxu0
  %v508 = vadd.f32 %v488, %v507
  %509 = vdwg.mxu0
  %510 = vmatpush.msra.mxu0 %v365
  %511 = vmatpush.msra.mxu0 %v364
  %512 = vmatpush.msra.mxu0 %v363
  %513 = vmatpush.msra.mxu0 %v362
  %514 = vmatpush.msra.mxu0 %v361
  %515 = vmatpush.msra.mxu0 %v360
  %516 = vmatpush.msra.mxu0 %v359
  %517 = vmatpush.msra.mxu0 %v358
  %518 = vmatpush.msra.mxu0 %v357
  %519 = vmatpush.msra.mxu0 %v356
  %520 = vmatpush.msra.mxu0 %v355
  %521 = vmatpush.msra.mxu0 %v354
  %522 = vmatpush.msra.mxu0 %v353
  %523 = vmatpush.msra.mxu0 %v352
  %524 = vmatpush.msra.mxu0 %v351
  %525 = vmatpush.msra.mxu0 %v350
  %526 = vmatmul.f32.gmra.mxu0 %v236
  %v527 = vpop.f32.mrf.mxu0
  %v528 = vadd.f32 %v508, %v527
  %529 = vdwg.mxu0
  %v530 = vpack.c.bf16 %v528, %v528
  %v531 = vld [vmem:[%s5] sm:$0xf]
  %v532 = vld [vmem:[%s5 + $0x4] sm:$0xf]
  %v533 = vld [vmem:[%s5 + $0x8] sm:$0xf]
  %v534 = vld [vmem:[%s5 + $0xc] sm:$0xf]
  %v535 = vld [vmem:[%s5 + $0x10] sm:$0xf]
  %v536 = vld [vmem:[%s5 + $0x14] sm:$0xf]
  %v537 = vld [vmem:[%s5 + $0x18] sm:$0xf]
  %v538 = vld [vmem:[%s5 + $0x1c] sm:$0xf]
  %v539 = vld [vmem:[%s5 + $0x20] sm:$0xf]
  %v540 = vld [vmem:[%s5 + $0x24] sm:$0xf]
  %v541 = vld [vmem:[%s5 + $0x28] sm:$0xf]
  %v542 = vld [vmem:[%s5 + $0x2c] sm:$0xf]
  %v543 = vld [vmem:[%s5 + $0x30] sm:$0xf]
  %v544 = vld [vmem:[%s5 + $0x34] sm:$0xf]
  %v545 = vld [vmem:[%s5 + $0x38] sm:$0xf]
  %v546 = vld [vmem:[%s5 + $0x3c] sm:$0xf]
  %v547 = vld [vmem:[%s6] sm:$0x1]
  %v549 = vperm.slane %v547, 0
  %v567 = vunpack.c.l.b16 %v531
  %v568 = vunpack.c.l.b16 %v532
  %v569 = vunpack.c.l.b16 %v533
  %v570 = vunpack.c.l.b16 %v534
  %v571 = vunpack.c.l.b16 %v535
  %v572 = vunpack.c.l.b16 %v536
  %v573 = vunpack.c.l.b16 %v537
  %v574 = vunpack.c.l.b16 %v538
  %v575 = vunpack.c.l.b16 %v539
  %v576 = vunpack.c.l.b16 %v540
  %v577 = vunpack.c.l.b16 %v541
  %v578 = vunpack.c.l.b16 %v542
  %v579 = vunpack.c.l.b16 %v543
  %v580 = vunpack.c.l.b16 %v544
  %v581 = vunpack.c.l.b16 %v545
  %v582 = vunpack.c.l.b16 %v546
  %v583 = vpack.c.b16 %v568, %v567
  %v584 = vpack.c.b16 %v570, %v569
  %v585 = vpack.c.b16 %v572, %v571
  %v586 = vpack.c.b16 %v574, %v573
  %v587 = vpack.c.b16 %v576, %v575
  %v588 = vpack.c.b16 %v578, %v577
  %v589 = vpack.c.b16 %v580, %v579
  %v590 = vpack.c.b16 %v582, %v581
  %599 = vmatpush.bf16.msra.mxu0 %v590
  %600 = vmatpush.bf16.msra.mxu0 %v589
  %601 = vmatpush.bf16.msra.mxu0 %v588
  %602 = vmatpush.bf16.msra.mxu0 %v587
  %603 = vmatpush.bf16.msra.mxu0 %v586
  %604 = vmatpush.bf16.msra.mxu0 %v585
  %605 = vmatpush.bf16.msra.mxu0 %v584
  %606 = vmatpush.bf16.msra.mxu0 %v583
  %607 = vmatmul.bf16.gmra.mxu0 %v530
  %v608 = vpop.f32.mrf.mxu0
  %v609 = vadd.f32 %v549, %v608
  %v610 = vpop.f32.mrf.mxu0
  %611 = vdwg.mxu0
  %v612 = vmax.f32 %v609, 0.0
  %v613 = vpack.c.bf16 %v612, %v612
  %v614 = vld [vmem:[%s7] sm:$0xf]
  %v615 = vld [vmem:[%s7 + $0x4] sm:$0xf]
  %v616 = vld [vmem:[%s7 + $0x8] sm:$0xf]
  %v617 = vld [vmem:[%s7 + $0xc] sm:$0xf]
  %v618 = vld [vmem:[%s7 + $0x10] sm:$0xf]
  %v619 = vld [vmem:[%s7 + $0x14] sm:$0xf]
  %v620 = vld [vmem:[%s7 + $0x18] sm:$0xf]
  %v621 = vld [vmem:[%s7 + $0x1c] sm:$0xf]
  %v622 = vld [vmem:[%s7 + $0x20] sm:$0xf]
  %v623 = vld [vmem:[%s7 + $0x24] sm:$0xf]
  %v624 = vld [vmem:[%s7 + $0x28] sm:$0xf]
  %v625 = vld [vmem:[%s7 + $0x2c] sm:$0xf]
  %v626 = vld [vmem:[%s7 + $0x30] sm:$0xf]
  %v627 = vld [vmem:[%s7 + $0x34] sm:$0xf]
  %v628 = vld [vmem:[%s7 + $0x38] sm:$0xf]
  %v629 = vld [vmem:[%s7 + $0x3c] sm:$0xf]
  %v630 = vld [vmem:[%s8] sm:$0x1]
  %v632 = vperm.slane %v630, 0
  %v650 = vunpack.c.l.b16 %v614
  %v651 = vunpack.c.l.b16 %v615
  %v652 = vunpack.c.l.b16 %v616
  %v653 = vunpack.c.l.b16 %v617
  %v654 = vunpack.c.l.b16 %v618
  %v655 = vunpack.c.l.b16 %v619
  %v656 = vunpack.c.l.b16 %v620
  %v657 = vunpack.c.l.b16 %v621
  %v658 = vunpack.c.l.b16 %v622
  %v659 = vunpack.c.l.b16 %v623
  %v660 = vunpack.c.l.b16 %v624
  %v661 = vunpack.c.l.b16 %v625
  %v662 = vunpack.c.l.b16 %v626
  %v663 = vunpack.c.l.b16 %v627
  %v664 = vunpack.c.l.b16 %v628
  %v665 = vunpack.c.l.b16 %v629
  %v666 = vpack.c.b16 %v651, %v650
  %v667 = vpack.c.b16 %v653, %v652
  %v668 = vpack.c.b16 %v655, %v654
  %v669 = vpack.c.b16 %v657, %v656
  %v670 = vpack.c.b16 %v659, %v658
  %v671 = vpack.c.b16 %v661, %v660
  %v672 = vpack.c.b16 %v663, %v662
  %v673 = vpack.c.b16 %v665, %v664
  %682 = vmatpush.bf16.msra.mxu0 %v673
  %683 = vmatpush.bf16.msra.mxu0 %v672
  %684 = vmatpush.bf16.msra.mxu0 %v671
  %685 = vmatpush.bf16.msra.mxu0 %v670
  %686 = vmatpush.bf16.msra.mxu0 %v669
  %687 = vmatpush.bf16.msra.mxu0 %v668
  %688 = vmatpush.bf16.msra.mxu0 %v667
  %689 = vmatpush.bf16.msra.mxu0 %v666
  %690 = vmatmul.bf16.gmra.mxu0 %v613
  %v691 = vpop.f32.mrf.mxu0
  %v692 = vadd.f32 %v632, %v691
  %v693 = vpop.f32.mrf.mxu0
  %694 = vdwg.mxu0
  %v695 = vmax.f32 %v692, 0.0
  %v696 = vpack.c.bf16 %v695, %v695
  %v697 = vld [vmem:[%s9] sm:$0xf]
  %v698 = vld [vmem:[%s9 + $0x4] sm:$0xf]
  %v699 = vld [vmem:[%s9 + $0x8] sm:$0xf]
  %v700 = vld [vmem:[%s9 + $0xc] sm:$0xf]
  %v701 = vld [vmem:[%s9 + $0x10] sm:$0xf]
  %v702 = vld [vmem:[%s9 + $0x14] sm:$0xf]
  %v703 = vld [vmem:[%s9 + $0x18] sm:$0xf]
  %v704 = vld [vmem:[%s9 + $0x1c] sm:$0xf]
  %v705 = vld [vmem:[%s9 + $0x20] sm:$0xf]
  %v706 = vld [vmem:[%s9 + $0x24] sm:$0xf]
  %v707 = vld [vmem:[%s9 + $0x28] sm:$0xf]
  %v708 = vld [vmem:[%s9 + $0x2c] sm:$0xf]
  %v709 = vld [vmem:[%s9 + $0x30] sm:$0xf]
  %v710 = vld [vmem:[%s9 + $0x34] sm:$0xf]
  %v711 = vld [vmem:[%s9 + $0x38] sm:$0xf]
  %v712 = vld [vmem:[%s9 + $0x3c] sm:$0xf]
  %s713 = sld [smem:[#allocation2]]
  %v714 = vstv %s713
  %v731 = vunpack.c.l.b16 %v697
  %v732 = vunpack.c.l.b16 %v698
  %v733 = vunpack.c.l.b16 %v699
  %v734 = vunpack.c.l.b16 %v700
  %v735 = vunpack.c.l.b16 %v701
  %v736 = vunpack.c.l.b16 %v702
  %v737 = vunpack.c.l.b16 %v703
  %v738 = vunpack.c.l.b16 %v704
  %v739 = vunpack.c.l.b16 %v705
  %v740 = vunpack.c.l.b16 %v706
  %v741 = vunpack.c.l.b16 %v707
  %v742 = vunpack.c.l.b16 %v708
  %v743 = vunpack.c.l.b16 %v709
  %v744 = vunpack.c.l.b16 %v710
  %v745 = vunpack.c.l.b16 %v711
  %v746 = vunpack.c.l.b16 %v712
  %v747 = vpack.c.b16 %v732, %v731
  %v748 = vpack.c.b16 %v734, %v733
  %v749 = vpack.c.b16 %v736, %v735
  %v750 = vpack.c.b16 %v738, %v737
  %v751 = vpack.c.b16 %v740, %v739
  %v752 = vpack.c.b16 %v742, %v741
  %v753 = vpack.c.b16 %v744, %v743
  %v754 = vpack.c.b16 %v746, %v745
  %763 = vmatpush.bf16.msra.mxu0 %v754
  %764 = vmatpush.bf16.msra.mxu0 %v753
  %765 = vmatpush.bf16.msra.mxu0 %v752
  %766 = vmatpush.bf16.msra.mxu0 %v751
  %767 = vmatpush.bf16.msra.mxu0 %v750
  %768 = vmatpush.bf16.msra.mxu0 %v749
  %769 = vmatpush.bf16.msra.mxu0 %v748
  %770 = vmatpush.bf16.msra.mxu0 %v747
  %771 = vmatmul.bf16.gmra.mxu0 %v696
  %v772 = vpop.f32.mrf.mxu0
  %v773 = vadd.f32 %v714, %v772
  %v774 = vpop.f32.mrf.mxu0
  %775 = vdwg.mxu0
  %v776 = vsub.f32 0.0, %v773
  %v777 = vmul.f32 %v776, 1.442695
  %v778 = vpow.pop %v777
  %v779 = vadd.f32 %v778, 1.0
  %v780 = vrcp.pop %v779
  %v781 = vmul.f32 %v780, 4.6051702
  %v782 = vadd.f32 %v781, -9.2103405
  %v783 = vmul.f32 %v782, 1.442695
  %v784 = vpow.pop %v783
  %785 = vst [vmem:[%s11] sm:$0xff] %v784
  // Predicated region
  $region46: #{sigma_net_forward.1} parent=0 // pred_check
    _
  $region47: #{sigma_net_forward.1} parent=0 // pred_check_branch
    %787 = sbr.rel (0) target = $region49
  $region48: #{sigma_net_forward.1} parent=0 // pred_region
    _
  $region49: #{sigma_net_forward.1} parent=0 // pred_fallthru
    _
  // Predicated region
  $region50: #{sigma_net_forward.1} parent=0 // pred_check
    _
  $region51: #{sigma_net_forward.1} parent=0 // pred_check_branch
    %789 = sbr.rel (0) target = $region53
  $region52: #{sigma_net_forward.1} parent=0 // pred_region
    _
  $region53: #{sigma_net_forward.1} parent=0 // pred_fallthru
    _

</llo_original>
